<compile_context>
chip_gen: v6e
topology: v6e:2x2x1
jax: 0.10.0
libtpu: 0.0.40
codegen_flags: <defaults>
</compile_context>

<pallas_src>
import functools

import jax
import jax.numpy as jnp
import numpy as np
from jax.experimental import pallas as pl
from jax.experimental.pallas import tpu as pltpu


def _clamp(v, lo, hi):
    return int(min(max(v, lo), hi))


# ---------------------------------------------------------------------------
# shared cross-entropy (mean reduction, integer class targets)
# ---------------------------------------------------------------------------
def _xe_mean(logits, tgt2d):
    b, c = logits.shape
    m = jnp.max(logits, axis=-1, keepdims=True)
    lse = m + jnp.log(jnp.sum(jnp.exp(logits - m), axis=-1, keepdims=True))   # [B,1]
    col = jax.lax.broadcasted_iota(jnp.int32, (b, c), 1)
    tgt_logit = jnp.sum(jnp.where(col == tgt2d, logits, 0.0),
                        axis=-1, keepdims=True)                               # [B,1]
    return jnp.mean(lse - tgt_logit)


# ---------------------------------------------------------------------------
# Kernel 1: tiled mean + covariance of the concept embeddings
# ---------------------------------------------------------------------------
def cov_kernel(c_ref, mu_ref, cov_ref, g_acc, s_acc, *, n_true, use_bf16):
    i = pl.program_id(0)

    @pl.when(i == 0)
    def _():
        g_acc[...] = jnp.zeros_like(g_acc)
        s_acc[...] = jnp.zeros_like(s_acc)

    c = c_ref[...]                                    # [tile_n, D] f32 (zero-padded rows ok)
    op = c.astype(jnp.bfloat16) if use_bf16 else c
    # Gram contraction on axis 0 (c^T @ c) without an explicit XLU transpose.
    g_acc[...] += jax.lax.dot_general(
        op, op, dimension_numbers=(((0,), (0,)), ((), ())),
        preferred_element_type=jnp.float32)
    s_acc[...] += jnp.sum(c, axis=0, keepdims=True)   # [1, D]

    @pl.when(i == pl.num_programs(0) - 1)
    def _():
        s = s_acc[...]                                # [1, D]  (= N * mu)
        mu = s * (1.0 / n_true)
        mu_ref[...] = mu
        # N * mu mu^T  as a K=1 contraction (outer product) on the MXU.
        outer = jax.lax.dot_general(
            mu, s, dimension_numbers=(((0,), (0,)), ((), ())),
            preferred_element_type=jnp.float32)       # [D, D]
        cov_ref[...] = (g_acc[...] - outer) * (1.0 / (n_true - 1))


def compute_mu_cov(concepts, *, tile_n=512, use_bf16=False):
    n, d = concepts.shape
    tile_n = min(tile_n, n)
    if tile_n < n:
        tile_n = max(8, (tile_n // 8) * 8)            # (8,128) sublane alignment
        n_pad = ((n + tile_n - 1) // tile_n) * tile_n
    else:
        n_pad = n
    if n_pad != n:
        # zero rows contribute nothing to G or s, so cov/mu stay exact.
        concepts = jnp.pad(concepts, ((0, n_pad - n), (0, 0)))

    grid = (n_pad // tile_n,)
    # VMEM budget: double-buffered input tile + (G,s) scratch + (cov,mu) outputs.
    # Kept <= 32 MiB so the same tiling is safe on v7x (64 MiB physical) and
    # under v5e's 16 MiB scoped default for small D.
    need = (2 * tile_n * d + 2 * (d * d + d)) * 4
    vmem_limit = _clamp(need + (8 << 20), 8 << 20, 32 << 20)

    kern = functools.partial(cov_kernel, n_true=n, use_bf16=use_bf16)
    return pl.pallas_call(
        kern,
        out_shape=(jax.ShapeDtypeStruct((1, d), jnp.float32),
                   jax.ShapeDtypeStruct((d, d), jnp.float32)),
        grid=grid,
        in_specs=[pl.BlockSpec((tile_n, d), lambda i: (i, 0))],
        out_specs=(pl.BlockSpec((1, d), lambda i: (0, 0)),
                   pl.BlockSpec((d, d), lambda i: (0, 0))),
        scratch_shapes=[pltpu.VMEM((d, d), jnp.float32),
                        pltpu.VMEM((1, d), jnp.float32)],
        compiler_params=pltpu.CompilerParams(
            dimension_semantics=("arbitrary",),       # reduction axis
            vmem_limit_bytes=vmem_limit),
    )(concepts)


# ---------------------------------------------------------------------------
# Kernel 2: cross-entropy + Mahalanobis regularization -> scalar loss
# ---------------------------------------------------------------------------
def loss_kernel(out_ref, tgt_ref, w_ref, mu_ref, sinv_ref, cov_ref, loss_ref,
                *, n_concepts, division_power):
    xe_loss = _xe_mean(out_ref[...], tgt_ref[...])

    mu = mu_ref[...]                                  # [1, D]
    sinv = sinv_ref[...]                              # [D, D]
    cov = cov_ref[...]                                # [D, D]

    # mean_i (c_i-mu)^T Sinv (c_i-mu) == (N-1)/N * tr(Sinv @ cov)  (cov symmetric)
    mean_distance = (float(n_concepts - 1) / float(n_concepts)) * jnp.sum(sinv * cov)

    # Mahalanobis distance of the L2-normalized weight rows.
    w = w_ref[...]                                    # [K, D]
    wn = w * jax.lax.rsqrt(jnp.sum(w * w, axis=-1, keepdims=True))
    dw = wn - mu
    qw = jnp.sum(dw * jnp.dot(dw, sinv, preferred_element_type=jnp.float32),
                 axis=-1)                             # diag(dw @ Sinv @ dw^T)
    mahalanobis_loss = jnp.mean(qw)

    scaled = (mahalanobis_loss - mean_distance) / (mean_distance ** division_power)
    loss_ref[0, 0] = xe_loss + jnp.abs(scaled)


def xe_kernel(out_ref, tgt_ref, loss_ref):
    loss_ref[0, 0] = _xe_mean(out_ref[...], tgt_ref[...])


# ---------------------------------------------------------------------------
# Wrapper
# ---------------------------------------------------------------------------
def stage1_criterion(outputs, targets, weights, concepts_encoded,
                     regularization=True, division_power=3,
                     cov_tile_n=512, use_bf16_gram=False):
    """JAX/Pallas equivalent of Stage1Criterion.forward."""
    outputs = outputs.astype(jnp.float32)
    b, c = outputs.shape
    tgt2d = targets.astype(jnp.int32).reshape(b, 1)

    if not regularization:
        # Short-circuit: skip covariance, inverse, and Mahalanobis entirely.
        return pl.pallas_call(
            xe_kernel,
            out_shape=jax.ShapeDtypeStruct((1, 1), jnp.float32),
            grid=(1,),
            in_specs=[pl.BlockSpec((b, c), lambda i: (0, 0)),
                      pl.BlockSpec((b, 1), lambda i: (0, 0))],
            out_specs=pl.BlockSpec((1, 1), lambda i: (0, 0)),
        )(outputs, tgt2d)[0, 0]

    weights = weights.astype(jnp.float32)
    concepts_encoded = concepts_encoded.astype(jnp.float32)
    k, d = weights.shape
    n, _ = concepts_encoded.shape

    mu, cov = compute_mu_cov(concepts_encoded, tile_n=cov_tile_n,
                             use_bf16=use_bf16_gram)

    # TODO(synk): matrix inversion / linear solve has no Pallas/Mosaic
    # equivalent; done in plain JAX.  Cholesky solve of the SPD covariance is
    # cheaper and better conditioned than torch.inverse (requires N-1 >= D).
    sigma_inv = jax.scipy.linalg.cho_solve(
        jax.scipy.linalg.cho_factor(cov), jnp.eye(d, dtype=jnp.float32))

    kern = functools.partial(loss_kernel, n_concepts=n,
                             division_power=division_power)
    need = (b * c + b + k * d + d + 2 * d * d + 1) * 4 * 2
    vmem_limit = _clamp(need + (8 << 20), 8 << 20, 32 << 20)
    loss = pl.pallas_call(
        kern,
        out_shape=jax.ShapeDtypeStruct((1, 1), jnp.float32),
        grid=(1,),
        in_specs=[
            pl.BlockSpec((b, c), lambda i: (0, 0)),   # outputs
            pl.BlockSpec((b, 1), lambda i: (0, 0)),   # targets (int32)
            pl.BlockSpec((k, d), lambda i: (0, 0)),   # weights
            pl.BlockSpec((1, d), lambda i: (0, 0)),   # mu
            pl.BlockSpec((d, d), lambda i: (0, 0)),   # sigma_inv
            pl.BlockSpec((d, d), lambda i: (0, 0)),   # cov (for the trace term)
        ],
        out_specs=pl.BlockSpec((1, 1), lambda i: (0, 0)),
        compiler_params=pltpu.CompilerParams(vmem_limit_bytes=vmem_limit),
    )(outputs, tgt2d, weights, mu, sigma_inv, cov)[0, 0]
    return loss


# ---------------------------------------------------------------------------
# Pure-JAX reference (mirrors the torch module) for verification
# ---------------------------------------------------------------------------
def _reference(outputs, targets, weights, concepts, division_power=3):
    logits = outputs.astype(jnp.float32)
    lse = jax.scipy.special.logsumexp(logits, axis=-1)
    tgt_logit = jnp.take_along_axis(logits, targets[:, None], axis=-1)[:, 0]
    xe = jnp.mean(lse - tgt_logit)

    mu = jnp.mean(concepts, axis=0)
    dc = concepts - mu[None, :]
    cov = dc.T @ dc / (concepts.shape[0] - 1)
    sinv = jnp.linalg.inv(cov)

    mean_dist = jnp.mean(jnp.sum(dc * (dc @ sinv), axis=-1))
    wn = weights / jnp.linalg.norm(weights, axis=-1, keepdims=True)
    dw = wn - mu[None, :]
    maha = jnp.mean(jnp.sum(dw * (dw @ sinv), axis=-1))
    scaled = (maha - mean_dist) / (mean_dist ** division_power)
    return xe + jnp.abs(scaled)


if __name__ == "__main__":
    # N > D so the covariance is full-rank / well-conditioned (as required by
    # the module's use of torch.inverse).
    B, C, K, D, N = 8, 16, 16, 32, 64

    key = jax.random.PRNGKey(0)
    k1, k2, k3, k4 = jax.random.split(key, 4)
    outputs = jax.random.normal(k1, (B, C), dtype=jnp.float32)
    targets = jax.random.randint(k2, (B,), 0, C, dtype=jnp.int32)
    weights = jax.random.normal(k3, (K, D), dtype=jnp.float32)
    concepts_encoded = jax.random.normal(k4, (N, D), dtype=jnp.float32)

    # cov_tile_n=16 -> 4-step accumulation grid, exercising init/finalize.
    loss = stage1_criterion(outputs, targets, weights, concepts_encoded,
                            regularization=True, division_power=3,
                            cov_tile_n=16)
    loss = jax.block_until_ready(loss)
    ref = _reference(outputs, targets, weights, concepts_encoded, 3)
    np.testing.assert_allclose(np.asarray(loss), np.asarray(ref),
                               rtol=1e-3, atol=1e-3)

    # Cross-entropy-only short-circuit path.
    xe_only = jax.block_until_ready(
        stage1_criterion(outputs, targets, weights, concepts_encoded,
                         regularization=False))
    lse = jax.scipy.special.logsumexp(outputs, axis=-1)
    xe_ref = jnp.mean(lse - jnp.take_along_axis(outputs, targets[:, None],
                                                axis=-1)[:, 0])
    np.testing.assert_allclose(np.asarray(xe_only), np.asarray(xe_ref),
                               rtol=1e-3, atol=1e-3)

    print("KERNEL_OK")
</pallas_src>

<mosaic_0001>
module attributes {stable_mosaic.version = 11 : i64} {
  func.func @cov_kernel(%arg0: i32, %arg1: memref<16x32xf32, #tpu.memory_space<vmem>>, %arg2: memref<1x32xf32, #tpu.memory_space<vmem>>, %arg3: memref<32x32xf32, #tpu.memory_space<vmem>>, %arg4: memref<32x32xf32, #tpu.memory_space<vmem>>, %arg5: memref<1x32xf32, #tpu.memory_space<vmem>>) attributes {dimension_semantics = [#tpu.dimension_semantics<arbitrary>], iteration_bounds = array<i64: 4>, scalar_prefetch = 0 : i64, scratch_operands = 2 : i64, tpu.core_type = #tpu.core_type<tc>, window_params = [{transform_indices = @transform_0, window_bounds = array<i64: 16, 32>}, {pipeline_mode = #tpu.pipeline_mode<synchronous>, transform_indices = @transform_1, window_bounds = array<i64: 1, 32>}, {pipeline_mode = #tpu.pipeline_mode<synchronous>, transform_indices = @transform_2, window_bounds = array<i64: 32, 32>}]} {
    %c0_i32 = arith.constant 0 : i32
    %0 = arith.cmpi eq, %arg0, %c0_i32 : i32
    %1 = arith.extui %0 : i1 to i32
    %c0_i32_0 = arith.constant 0 : i32
    %2 = arith.cmpi ne, %1, %c0_i32_0 : i32
    scf.if %2 {
      %cst_12 = arith.constant 0.000000e+00 : f32
      %16 = vector.broadcast %cst_12 : f32 to vector<32x32xf32>
      %c0_13 = arith.constant 0 : index
      %c0_14 = arith.constant 0 : index
      %17 = vector.load %arg4[%c0_13, %c0_14] : memref<32x32xf32, #tpu.memory_space<vmem>>, vector<32x32xf32>
      tpu.vector_store %arg4[%c0_13, %c0_14], %16 {strides = array<i32>} : memref<32x32xf32, #tpu.memory_space<vmem>>, vector<32x32xf32>,
      %cst_15 = arith.constant 0.000000e+00 : f32
      %18 = vector.broadcast %cst_15 : f32 to vector<1x32xf32>
      %c0_16 = arith.constant 0 : index
      %c0_17 = arith.constant 0 : index
      %19 = vector.load %arg5[%c0_16, %c0_17] : memref<1x32xf32, #tpu.memory_space<vmem>>, vector<1x32xf32>
      tpu.vector_store %arg5[%c0_16, %c0_17], %18 {strides = array<i32>} : memref<1x32xf32, #tpu.memory_space<vmem>>, vector<1x32xf32>,
    } else {
    }
    %c0 = arith.constant 0 : index
    %c0_1 = arith.constant 0 : index
    %3 = vector.load %arg1[%c0, %c0_1] : memref<16x32xf32, #tpu.memory_space<vmem>>, vector<16x32xf32>
    %c0_2 = arith.constant 0 : index
    %c0_3 = arith.constant 0 : index
    %4 = vector.load %arg4[%c0_2, %c0_3] : memref<32x32xf32, #tpu.memory_space<vmem>>, vector<32x32xf32>
    %cst = arith.constant dense<0.000000e+00> : vector<32x32xf32>
    %5 = tpu.matmul %3, %3, %cst {dimension_numbers = #tpu.dot_dimension_numbers<[0], [0], [1], [1], [0, 1, 1, 1], [], []>} : vector<16x32xf32>, vector<16x32xf32>, vector<32x32xf32> -> vector<32x32xf32>
    %6 = arith.addf %4, %5 : vector<32x32xf32>
    %c0_4 = arith.constant 0 : index
    %c0_5 = arith.constant 0 : index
    %7 = vector.load %arg4[%c0_4, %c0_5] : memref<32x32xf32, #tpu.memory_space<vmem>>, vector<32x32xf32>
    tpu.vector_store %arg4[%c0_4, %c0_5], %6 {strides = array<i32>} : memref<32x32xf32, #tpu.memory_space<vmem>>, vector<32x32xf32>,
    %c0_6 = arith.constant 0 : index
    %c0_7 = arith.constant 0 : index
    %8 = vector.load %arg5[%c0_6, %c0_7] : memref<1x32xf32, #tpu.memory_space<vmem>>, vector<1x32xf32>
    %cst_8 = arith.constant dense<0.000000e+00> : vector<32xf32>
    %9 = vector.multi_reduction <add>, %3, %cst_8 [0] : vector<16x32xf32> to vector<32xf32>
    %10 = vector.shape_cast %9 : vector<32xf32> to vector<1x32xf32>
    %11 = arith.addf %8, %10 : vector<1x32xf32>
    %c0_9 = arith.constant 0 : index
    %c0_10 = arith.constant 0 : index
    %12 = vector.load %arg5[%c0_9, %c0_10] : memref<1x32xf32, #tpu.memory_space<vmem>>, vector<1x32xf32>
    tpu.vector_store %arg5[%c0_9, %c0_10], %11 {strides = array<i32>} : memref<1x32xf32, #tpu.memory_space<vmem>>, vector<1x32xf32>,
    %c3_i32 = arith.constant 3 : i32
    %13 = arith.cmpi eq, %arg0, %c3_i32 : i32
    %14 = arith.extui %13 : i1 to i32
    %c0_i32_11 = arith.constant 0 : i32
    %15 = arith.cmpi ne, %14, %c0_i32_11 : i32
    scf.if %15 {
      %c0_12 = arith.constant 0 : index
      %c0_13 = arith.constant 0 : index
      %16 = vector.load %arg5[%c0_12, %c0_13] : memref<1x32xf32, #tpu.memory_space<vmem>>, vector<1x32xf32>
      %cst_14 = arith.constant 1.562500e-02 : f32
      %17 = vector.broadcast %cst_14 : f32 to vector<1x32xf32>
      %18 = arith.mulf %16, %17 : vector<1x32xf32>
      %c0_15 = arith.constant 0 : index
      %c0_16 = arith.constant 0 : index
      %19 = vector.load %arg2[%c0_15, %c0_16] : memref<1x32xf32, #tpu.memory_space<vmem>>, vector<1x32xf32>
      tpu.vector_store %arg2[%c0_15, %c0_16], %18 {strides = array<i32>} : memref<1x32xf32, #tpu.memory_space<vmem>>, vector<1x32xf32>,
      %cst_17 = arith.constant dense<0.000000e+00> : vector<32x32xf32>
      %20 = tpu.matmul %18, %16, %cst_17 {dimension_numbers = #tpu.dot_dimension_numbers<[0], [0], [1], [1], [0, 1, 1, 1], [], []>} : vector<1x32xf32>, vector<1x32xf32>, vector<32x32xf32> -> vector<32x32xf32>
      %c0_18 = arith.constant 0 : index
      %c0_19 = arith.constant 0 : index
      %21 = vector.load %arg4[%c0_18, %c0_19] : memref<32x32xf32, #tpu.memory_space<vmem>>, vector<32x32xf32>
      %22 = arith.subf %21, %20 : vector<32x32xf32>
      %cst_20 = arith.constant 0.0158730168 : f32
      %23 = vector.broadcast %cst_20 : f32 to vector<32x32xf32>
      %24 = arith.mulf %22, %23 : vector<32x32xf32>
      %c0_21 = arith.constant 0 : index
      %c0_22 = arith.constant 0 : index
      %25 = vector.load %arg3[%c0_21, %c0_22] : memref<32x32xf32, #tpu.memory_space<vmem>>, vector<32x32xf32>
      tpu.vector_store %arg3[%c0_21, %c0_22], %24 {strides = array<i32>} : memref<32x32xf32, #tpu.memory_space<vmem>>, vector<32x32xf32>,
    } else {
    }
    return
  }
  func.func @transform_0(%arg0: i32) -> (i32, i32) {
    %c0_i32 = arith.constant 0 : i32
    %c0_i32_0 = arith.constant 0 : i32
    return %arg0, %c0_i32 : i32, i32
  }
  func.func @transform_1(%arg0: i32) -> (i32, i32) {
    %c0_i32 = arith.constant 0 : i32
    %c0_i32_0 = arith.constant 0 : i32
    %c0_i32_1 = arith.constant 0 : i32
    return %c0_i32, %c0_i32_0 : i32, i32
  }
  func.func @transform_2(%arg0: i32) -> (i32, i32) {
    %c0_i32 = arith.constant 0 : i32
    %c0_i32_0 = arith.constant 0 : i32
    %c0_i32_1 = arith.constant 0 : i32
    return %c0_i32, %c0_i32_0 : i32, i32
  }
}

</mosaic_0001>

<llo_original>
// kernel: tpu_custom_call.1
$region0: #{tpu_custom_call.1}
  #allocation0 [shape = 'u32[]', space=smem, size = 0x4, offset = 0x4, fixed_abs, tag = 'smem constant byte address 0x4 - core index']
  #allocation1 [shape = 'u32[144,128]{1,0:T(1,128)}', space=vmem, size = 0x12000, scoped, tag = 'internal scratch']
  #allocation2 [shape = 'f32[32,32]{1,0:T(8,128)}', space=vmem, size = 0x4000, scoped, tag = 'scratch operand']
  #allocation3 [shape = 'f32[1,32]{1,0:T(1,128)}', space=vmem, size = 0x200, scoped, tag = 'scratch operand']
  %s0 = inlined_call_operand.vmem [shape: f32[64,32], index: 0, kind: input, shape index: {}]
  %s1 = inlined_call_operand.hbm [shape: f32[1,32], index: 1, kind: output, shape index: {0}]
  %s2 = inlined_call_operand.hbm [shape: f32[32,32], index: 2, kind: output, shape index: {1}]
  %3 = xla_tuple %s1, %s2
  %s4 = sld [smem:[#allocation0]]
  $region53: #{tpu_custom_call.1} parent=0
    _
  %s6 = ssub.s32 1, %s4
  %s7 = scalar_select 0, %s6, %s4
  $region1: #{tpu_custom_call.1} parent=0
    #allocation4 [shape = 'u8[512]{0}', space=vmem, size = 0x400, scoped, tag = 'output window, operand 0, single buffered']
    #allocation5 [shape = 's32[2]{0}', space=sflag, size = 0x8, scoped, tag = 'scoped memory for tpu_custom_call.1']
    #allocation6 [shape = 'u8[16384]{0}', space=vmem, size = 0x4000, scoped, tag = 'output window, operand 1, single buffered']
    #allocation7 [shape = 's32[1]{0}', space=sflag, size = 0x4, scoped, tag = 'scoped memory for tpu_custom_call.1']
    %8 = vsyncpa [#allocation5], 0
    %9 = vsyncpa [#allocation7], 0
    loop: start=0, step=1, limit=6
    $region2: #{tpu_custom_call.1} parent=1 // loop_pre_header
      _
    $region3: #{tpu_custom_call.1} parent=1 // loop_header
      %s11 = sphi 0, %s15
      %p12 = scmp.ge.s32.totalorder %s11, 6
      %s21 = sphi 0, %s23
      %s24 = sphi 0, %s21
      %s25 = sphi 0, %s24
      %s41 = sphi 0, %s25
      %s45 = sphi 0, %s45
      %s47 = sphi 0, %s45
      %s48 = sphi 0, %s47
      %s62 = sphi 0, %s48
      %s66 = sphi 0, %s66
      %s68 = sphi 0, %s66
      %s69 = sphi 0, %s68
      %s83 = sphi 0, %s69
    $region4: #{tpu_custom_call.1} parent=1 // loop_header_branch
      %14 = sbr.rel (%p12) target = $region8
    $region5: #{tpu_custom_call.1} parent=1 // loop_body
      %s16 = ssub.s32 %s11, 1
      %s17 = ssub.s32 %s11, 2
      %s18 = sadd.s32 %s11, 1
      %s19 = ssub.s32 %s11, %s18
      %p20 = scmp.eq.s32.totalorder %s19, 0
      %s22 = sadd.s32 %s21, 1
      %s23 = scalar_select %p20, %s21, %s22
      %p26 = pneg %p20
      %p27 = scmp.eq.s32.totalorder %s11, 3
      %p28 = por %p26, %p27
      %p29 = scmp.ne.s32.totalorder %s21, %s24
      %p30 = scmp.eq.s32.totalorder %s11, 0
      %p31 = por %p29, %p30
      %p32 = scmp.ne.s32.totalorder %s21, %s24
      %p33 = scmp.eq.s32.totalorder %s16, 3
      %p34 = por %p32, %p33
      %p35 = scmp.ne.s32.totalorder %s24, %s25
      %p36 = scmp.eq.s32.totalorder %s16, 0
      %p37 = por %p35, %p36
      %p38 = scmp.ne.s32.totalorder %s24, %s25
      %p39 = scmp.eq.s32.totalorder %s17, 3
      %p40 = por %p38, %p39
      %p42 = scmp.ne.s32.totalorder %s25, %s41
      %p43 = scmp.eq.s32.totalorder %s17, 0
      %p44 = por %p42, %p43
      %s46 = sadd.s32 %s45, 1
      %p49 = scmp.eq.s32.totalorder %s11, 3
      %p50 = scmp.ne.s32.totalorder %s45, %s47
      %p51 = scmp.eq.s32.totalorder %s11, 0
      %p52 = por %p50, %p51
      %p53 = scmp.ne.s32.totalorder %s45, %s47
      %p54 = scmp.eq.s32.totalorder %s16, 3
      %p55 = por %p53, %p54
      %p56 = scmp.ne.s32.totalorder %s47, %s48
      %p57 = scmp.eq.s32.totalorder %s16, 0
      %p58 = por %p56, %p57
      %p59 = scmp.ne.s32.totalorder %s47, %s48
      %p60 = scmp.eq.s32.totalorder %s17, 3
      %p61 = por %p59, %p60
      %p63 = scmp.ne.s32.totalorder %s48, %s62
      %p64 = scmp.eq.s32.totalorder %s17, 0
      %p65 = por %p63, %p64
      %s67 = sadd.s32 %s66, 1
      %p70 = scmp.eq.s32.totalorder %s11, 3
      %p71 = scmp.ne.s32.totalorder %s66, %s68
      %p72 = scmp.eq.s32.totalorder %s11, 0
      %p73 = por %p71, %p72
      %p74 = scmp.ne.s32.totalorder %s66, %s68
      %p75 = scmp.eq.s32.totalorder %s16, 3
      %p76 = por %p74, %p75
      %p77 = scmp.ne.s32.totalorder %s68, %s69
      %p78 = scmp.eq.s32.totalorder %s16, 0
      %p79 = por %p77, %p78
      %p80 = scmp.ne.s32.totalorder %s68, %s69
      %p81 = scmp.eq.s32.totalorder %s17, 3
      %p82 = por %p80, %p81
      %p84 = scmp.ne.s32.totalorder %s69, %s83
      %p85 = scmp.eq.s32.totalorder %s17, 0
      %p86 = por %p84, %p85
      %p87 = scmp.le.s32.totalorder 1, %s11
      %p88 = scmp.lt.s32.totalorder %s11, 5
      %p89 = pnand %p87, %p88
      %p90 = pneg %p89
      // Predicated region
      $region9: #{tpu_custom_call.1} parent=5 // pred_check
        _
      $region10: #{tpu_custom_call.1} parent=5 // pred_check_branch
        %92 = sbr.rel (%p89) target = $region12
      $region11: #{tpu_custom_call.1} parent=5 // pred_region
        %s93 = ssub.s32 %s11, 1
      $region12: #{tpu_custom_call.1} parent=5 // pred_fallthru
        _
      %p94 = scmp.lt.s32.totalorder %s11, 4
      // Predicated region
      $region13: #{tpu_custom_call.1} parent=5 // pred_check
        %p95 = pneg %p94
      $region14: #{tpu_custom_call.1} parent=5 // pred_check_branch
        %97 = sbr.rel (%p95) target = $region16
      $region15: #{tpu_custom_call.1} parent=5 // pred_region
        // Predicated region
        $region17: #{tpu_custom_call.1} parent=15 // pred_check
          %p98 = pneg %p31
        $region18: #{tpu_custom_call.1} parent=15 // pred_check_branch
          %100 = sbr.rel (%p98) target = $region20
        $region19: #{tpu_custom_call.1} parent=15 // pred_region
          %s101 = smul.u32 2, %s11
          %p102 = scmp.lt.s32.totalorder %s101, 7
          %s103 = scalar_select %p102, %s101, 7
          %s104 = smul.addr %s103, 8
          %s105 = scalar_lea.vmem %s0, %s104
          %s106 = smul.u32 2, %s11
        $region20: #{tpu_custom_call.1} parent=15 // pred_fallthru
          _
      $region16: #{tpu_custom_call.1} parent=5 // pred_fallthru
        _
      %p107 = scmp.le.s32.totalorder 1, %s11
      %p108 = scmp.lt.s32.totalorder %s11, 5
      %p109 = pnand %p107, %p108
      %p110 = pneg %p109
      // Predicated region
      $region21: #{tpu_custom_call.1} parent=5 // pred_check
        _
      $region22: #{tpu_custom_call.1} parent=5 // pred_check_branch
        %112 = sbr.rel (%p109) target = $region24
      $region23: #{tpu_custom_call.1} parent=5 // pred_region
        %s113 = ssub.s32 %s11, 1
        %s114 = smul.u32 2, %s16
        %p115 = scmp.lt.s32.totalorder %s114, 7
        %s116 = scalar_select %p115, %s114, 7
        %s117 = smul.addr %s116, 8
        %s118 = scalar_lea.vmem %s0, %s117
        %p119 = pneg %p37
        %p120 = pneg %p34
        %p121 = pneg %p58
        %p122 = pneg %p55
        %p123 = pneg %p79
        %p124 = pneg %p76
        %s125 = smul.u32 2, %s16
        %p126 = scmp.lt.s32.totalorder %s125, 7
        %s127 = scalar_select %p126, %s125, 7
        %s128 = smul.addr %s127, 8
        %s129 = scalar_lea.vmem %s0, %s128
        %s130 = smul.u32 2, %s16
        %p131 = scmp.eq.s32.totalorder %s16, 0
        // Predicated region
        $region25: #{tpu_custom_call.1} parent=23 // pred_check
          %p132 = pneg %p131
        $region26: #{tpu_custom_call.1} parent=23 // pred_check_branch
          %134 = sbr.rel (%p132) target = $region28
        $region27: #{tpu_custom_call.1} parent=23 // pred_region
          %vm135 = vcmask 261120
          %136 = vst.msk [vmem:[#allocation2] sm:$0xff] %vm135, 0.0
          %137 = vst.msk [vmem:[#allocation2 + $0x8] sm:$0xff] %vm135, 0.0
          %138 = vst.msk [vmem:[#allocation2 + $0x10] sm:$0xff] %vm135, 0.0
          %139 = vst.msk [vmem:[#allocation2 + $0x18] sm:$0xff] %vm135, 0.0
          %vm140 = vcmask 253952
          %141 = vst.msk [vmem:[#allocation3] sm:$0x1] %vm140, 0.0
        $region28: #{tpu_custom_call.1} parent=23 // pred_fallthru
          _
        %v142 = vld [vmem:[%s129] sm:$0xff]
        %v143 = vld [vmem:[%s129 + $0x8] sm:$0xff]
        %v144 = vld [vmem:[#allocation2] sm:$0xff]
        %v145 = vld [vmem:[#allocation2 + $0x8] sm:$0xff]
        %v146 = vld [vmem:[#allocation2 + $0x10] sm:$0xff]
        %v147 = vld [vmem:[#allocation2 + $0x18] sm:$0xff]
        %148 = vxpose.xlu0.b32.start [1/16] %v142, 128
        %149 = vxpose.xlu0.b32.cont [2/16] %v143, 128
        %150 = vxpose.xlu0.b32.cont [3/16] 0.0, 128
        %151 = vxpose.xlu0.b32.cont [4/16] 0.0, 128
        %152 = vxpose.xlu0.b32.cont [5/16] 0.0, 128
        %153 = vxpose.xlu0.b32.cont [6/16] 0.0, 128
        %154 = vxpose.xlu0.b32.cont [7/16] 0.0, 128
        %155 = vxpose.xlu0.b32.cont [8/16] 0.0, 128
        %156 = vxpose.xlu0.b32.cont [9/16] 0.0, 128
        %157 = vxpose.xlu0.b32.cont [10/16] 0.0, 128
        %158 = vxpose.xlu0.b32.cont [11/16] 0.0, 128
        %159 = vxpose.xlu0.b32.cont [12/16] 0.0, 128
        %160 = vxpose.xlu0.b32.cont [13/16] 0.0, 128
        %161 = vxpose.xlu0.b32.cont [14/16] 0.0, 128
        %162 = vxpose.xlu0.b32.cont [15/16] 0.0, 128
        %163 = vxpose.xlu0.b32.end [16/16] 0.0, 128
        %v164 = vpop.trf.xlu0
        %v165 = vpop.trf.xlu0
        %v166 = vpop.trf.xlu0
        %v167 = vpop.trf.xlu0
        %v168 = vpop.trf.xlu0
        %v169 = vpop.trf.xlu0
        %v170 = vpop.trf.xlu0
        %v171 = vpop.trf.xlu0
        %v172 = vpop.trf.xlu0
        %v173 = vpop.trf.xlu0
        %v174 = vpop.trf.xlu0
        %v175 = vpop.trf.xlu0
        %v176 = vpop.trf.xlu0
        %v177 = vpop.trf.xlu0
        %v178 = vpop.trf.xlu0
        %v179 = vpop.trf.xlu0
        %vm180 = vcmask 130048
        %v182 = vsel %vm180, %v164, 0
        %v185 = vsel %vm180, %v165, 0
        %v188 = vsel %vm180, %v166, 0
        %v191 = vsel %vm180, %v167, 0
        %193 = vmatprep.subr.mxu0 0.0
        %194 = vmatpush1.msra.mxu0 0.0
        %195 = vmatprep.subr.mxu0 0.0
        %196 = vmatpush1.msra.mxu0 0.0
        %197 = vmatprep.subr.mxu0 0.0
        %198 = vmatpush1.msra.mxu0 0.0
        %199 = vmatprep.subr.mxu0 0.0
        %200 = vmatpush1.msra.mxu0 0.0
        %201 = vmatprep.subr.mxu0 0.0
        %202 = vmatpush1.msra.mxu0 0.0
        %203 = vmatprep.subr.mxu0 0.0
        %204 = vmatpush1.msra.mxu0 0.0
        %205 = vmatprep.subr.mxu0 0.0
        %206 = vmatpush1.msra.mxu0 0.0
        %207 = vmatprep.subr.mxu0 0.0
        %208 = vmatpush1.msra.mxu0 0.0
        %209 = vmatprep.subr.mxu0 0.0
        %210 = vmatpush1.msra.mxu0 0.0
        %211 = vmatprep.subr.mxu0 0.0
        %212 = vmatpush1.msra.mxu0 0.0
        %213 = vmatprep.subr.mxu0 0.0
        %214 = vmatpush1.msra.mxu0 0.0
        %215 = vmatprep.subr.mxu0 0.0
        %216 = vmatpush1.msra.mxu0 0.0
        %217 = vmatprep.subr.mxu0 0.0
        %218 = vmatpush1.msra.mxu0 0.0
        %219 = vmatprep.subr.mxu0 0.0
        %220 = vmatpush1.msra.mxu0 0.0
        %221 = vmatprep.subr.mxu0 0.0
        %222 = vmatpush1.msra.mxu0 %v143
        %223 = vmatprep.subr.mxu0 0.0
        %224 = vmatpush1.msra.mxu0 %v142
        %225 = vmatprep.subr.mxu0 0.0
        %226 = vmatpush2.msra.mxu0 0.0
        %227 = vmatprep.subr.mxu0 0.0
        %228 = vmatpush2.msra.mxu0 0.0
        %229 = vmatprep.subr.mxu0 0.0
        %230 = vmatpush2.msra.mxu0 0.0
        %231 = vmatprep.subr.mxu0 0.0
        %232 = vmatpush2.msra.mxu0 0.0
        %233 = vmatprep.subr.mxu0 0.0
        %234 = vmatpush2.msra.mxu0 0.0
        %235 = vmatprep.subr.mxu0 0.0
        %236 = vmatpush2.msra.mxu0 0.0
        %237 = vmatprep.subr.mxu0 0.0
        %238 = vmatpush2.msra.mxu0 0.0
        %239 = vmatprep.subr.mxu0 0.0
        %240 = vmatpush2.msra.mxu0 0.0
        %241 = vmatprep.subr.mxu0 0.0
        %242 = vmatpush2.msra.mxu0 0.0
        %243 = vmatprep.subr.mxu0 0.0
        %244 = vmatpush2.msra.mxu0 0.0
        %245 = vmatprep.subr.mxu0 0.0
        %246 = vmatpush2.msra.mxu0 0.0
        %247 = vmatprep.subr.mxu0 0.0
        %248 = vmatpush2.msra.mxu0 0.0
        %249 = vmatprep.subr.mxu0 0.0
        %250 = vmatpush2.msra.mxu0 0.0
        %251 = vmatprep.subr.mxu0 0.0
        %252 = vmatpush2.msra.mxu0 0.0
        %253 = vmatprep.subr.mxu0 0.0
        %254 = vmatpush2.msra.mxu0 0.0
        %255 = vmatprep.subr.mxu0 0.0
        %256 = vmatpush2.msra.mxu0 0.0
        %257 = vmatprep.mubr.f32.mxu0 0.0
        %258 = vmatmul.mubr.f32.gmra.mxu0 %v182
        %v259 = vpop.f32.mrf.mxu0
        %v260 = vadd.f32 0.0, %v259
        %v261 = vpop.f32.mrf.mxu0
        %262 = vmatprep.mubr.f32.mxu0 0.0
        %263 = vmatmul.mubr.f32.gmra.mxu0 %v185
        %v264 = vpop.f32.mrf.mxu0
        %v265 = vadd.f32 0.0, %v264
        %v266 = vpop.f32.mrf.mxu0
        %267 = vmatprep.mubr.f32.mxu0 0.0
        %268 = vmatmul.mubr.f32.gmra.mxu0 %v188
        %v269 = vpop.f32.mrf.mxu0
        %v270 = vadd.f32 0.0, %v269
        %v271 = vpop.f32.mrf.mxu0
        %272 = vmatprep.mubr.f32.mxu0 0.0
        %273 = vmatmul.mubr.f32.gmra.mxu0 %v191
        %v274 = vpop.f32.mrf.mxu0
        %v275 = vadd.f32 0.0, %v274
        %v276 = vpop.f32.mrf.mxu0
        %277 = vdwg.mxu0
        %v278 = vadd.f32 %v144, %v260
        %v279 = vadd.f32 %v145, %v265
        %v280 = vadd.f32 %v146, %v270
        %v281 = vadd.f32 %v147, %v275
        %vm282 = vcmask 261120
        %283 = vst.msk [vmem:[#allocation2] sm:$0xff] %vm282, %v278
        %284 = vst.msk [vmem:[#allocation2 + $0x8] sm:$0xff] %vm282, %v279
        %285 = vst.msk [vmem:[#allocation2 + $0x10] sm:$0xff] %vm282, %v280
        %286 = vst.msk [vmem:[#allocation2 + $0x18] sm:$0xff] %vm282, %v281
        %v287 = vld [vmem:[#allocation3] sm:$0x1]
        %v288 = vsel %vm282, %v142, 0.0
        %v289 = vsel %vm282, %v143, 0.0
        %v290 = vadd.f32 %v288, %v289
        %v291 = vrot.slane %v290, 4
        %v292 = vadd.f32 %v290, %v291
        %v293 = vrot.slane %v292, 2
        %v294 = vadd.f32 %v292, %v293
        %v295 = vrot.slane %v294, 1
        %v296 = vadd.f32 %v294, %v295
        %v297 = vadd.f32 %v287, %v296
        %vm298 = vcmask 253952
        %299 = vst.msk [vmem:[#allocation3] sm:$0x1] %vm298, %v297
        %p300 = scmp.eq.s32.totalorder %s16, 3
        // Predicated region
        $region29: #{tpu_custom_call.1} parent=23 // pred_check
          %p301 = pneg %p300
        $region30: #{tpu_custom_call.1} parent=23 // pred_check_branch
          %303 = sbr.rel (%p301) target = $region32
        $region31: #{tpu_custom_call.1} parent=23 // pred_region
          %v304 = vld [vmem:[#allocation3] sm:$0x1]
          %v305 = vmul.f32 %v304, 0.015625
          %306 = vst.msk [vmem:[#allocation4] sm:$0x1] %vm298, %v305
          %307 = vxpose.xlu0.b32.start [1/16] %v305, 128
          %308 = vxpose.xlu0.b32.cont [2/16] 0.0, 128
          %309 = vxpose.xlu0.b32.cont [3/16] 0.0, 128
          %310 = vxpose.xlu0.b32.cont [4/16] 0.0, 128
          %311 = vxpose.xlu0.b32.cont [5/16] 0.0, 128
          %312 = vxpose.xlu0.b32.cont [6/16] 0.0, 128
          %313 = vxpose.xlu0.b32.cont [7/16] 0.0, 128
          %314 = vxpose.xlu0.b32.cont [8/16] 0.0, 128
          %315 = vxpose.xlu0.b32.cont [9/16] 0.0, 128
          %316 = vxpose.xlu0.b32.cont [10/16] 0.0, 128
          %317 = vxpose.xlu0.b32.cont [11/16] 0.0, 128
          %318 = vxpose.xlu0.b32.cont [12/16] 0.0, 128
          %319 = vxpose.xlu0.b32.cont [13/16] 0.0, 128
          %320 = vxpose.xlu0.b32.cont [14/16] 0.0, 128
          %321 = vxpose.xlu0.b32.cont [15/16] 0.0, 128
          %322 = vxpose.xlu0.b32.end [16/16] 0.0, 128
          %v323 = vpop.trf.xlu0
          %v324 = vpop.trf.xlu0
          %v325 = vpop.trf.xlu0
          %v326 = vpop.trf.xlu0
          %v327 = vpop.trf.xlu0
          %v328 = vpop.trf.xlu0
          %v329 = vpop.trf.xlu0
          %v330 = vpop.trf.xlu0
          %v331 = vpop.trf.xlu0
          %v332 = vpop.trf.xlu0
          %v333 = vpop.trf.xlu0
          %v334 = vpop.trf.xlu0
          %v335 = vpop.trf.xlu0
          %v336 = vpop.trf.xlu0
          %v337 = vpop.trf.xlu0
          %v338 = vpop.trf.xlu0
          %vm339 = vcmask 7168
          %v341 = vsel %vm339, %v323, 0
          %v344 = vsel %vm339, %v324, 0
          %v347 = vsel %vm339, %v325, 0
          %v350 = vsel %vm339, %v326, 0
          %vm352 = vcmask 1040384
          %v354 = vsel %vm352, %v304, 0
          %356 = vmatprep.subr.mxu0 0.0
          %357 = vmatpush1.msra.mxu0 0.0
          %358 = vmatprep.subr.mxu0 0.0
          %359 = vmatpush1.msra.mxu0 0.0
          %360 = vmatprep.subr.mxu0 0.0
          %361 = vmatpush1.msra.mxu0 0.0
          %362 = vmatprep.subr.mxu0 0.0
          %363 = vmatpush1.msra.mxu0 0.0
          %364 = vmatprep.subr.mxu0 0.0
          %365 = vmatpush1.msra.mxu0 0.0
          %366 = vmatprep.subr.mxu0 0.0
          %367 = vmatpush1.msra.mxu0 0.0
          %368 = vmatprep.subr.mxu0 0.0
          %369 = vmatpush1.msra.mxu0 0.0
          %370 = vmatprep.subr.mxu0 0.0
          %371 = vmatpush1.msra.mxu0 0.0
          %372 = vmatprep.subr.mxu0 0.0
          %373 = vmatpush1.msra.mxu0 0.0
          %374 = vmatprep.subr.mxu0 0.0
          %375 = vmatpush1.msra.mxu0 0.0
          %376 = vmatprep.subr.mxu0 0.0
          %377 = vmatpush1.msra.mxu0 0.0
          %378 = vmatprep.subr.mxu0 0.0
          %379 = vmatpush1.msra.mxu0 0.0
          %380 = vmatprep.subr.mxu0 0.0
          %381 = vmatpush1.msra.mxu0 0.0
          %382 = vmatprep.subr.mxu0 0.0
          %383 = vmatpush1.msra.mxu0 0.0
          %384 = vmatprep.subr.mxu0 0.0
          %385 = vmatpush1.msra.mxu0 0.0
          %386 = vmatprep.subr.mxu0 0.0
          %387 = vmatpush1.msra.mxu0 %v354
          %388 = vmatprep.subr.mxu0 0.0
          %389 = vmatpush2.msra.mxu0 0.0
          %390 = vmatprep.subr.mxu0 0.0
          %391 = vmatpush2.msra.mxu0 0.0
          %392 = vmatprep.subr.mxu0 0.0
          %393 = vmatpush2.msra.mxu0 0.0
          %394 = vmatprep.subr.mxu0 0.0
          %395 = vmatpush2.msra.mxu0 0.0
          %396 = vmatprep.subr.mxu0 0.0
          %397 = vmatpush2.msra.mxu0 0.0
          %398 = vmatprep.subr.mxu0 0.0
          %399 = vmatpush2.msra.mxu0 0.0
          %400 = vmatprep.subr.mxu0 0.0
          %401 = vmatpush2.msra.mxu0 0.0
          %402 = vmatprep.subr.mxu0 0.0
          %403 = vmatpush2.msra.mxu0 0.0
          %404 = vmatprep.subr.mxu0 0.0
          %405 = vmatpush2.msra.mxu0 0.0
          %406 = vmatprep.subr.mxu0 0.0
          %407 = vmatpush2.msra.mxu0 0.0
          %408 = vmatprep.subr.mxu0 0.0
          %409 = vmatpush2.msra.mxu0 0.0
          %410 = vmatprep.subr.mxu0 0.0
          %411 = vmatpush2.msra.mxu0 0.0
          %412 = vmatprep.subr.mxu0 0.0
          %413 = vmatpush2.msra.mxu0 0.0
          %414 = vmatprep.subr.mxu0 0.0
          %415 = vmatpush2.msra.mxu0 0.0
          %416 = vmatprep.subr.mxu0 0.0
          %417 = vmatpush2.msra.mxu0 0.0
          %418 = vmatprep.subr.mxu0 0.0
          %419 = vmatpush2.msra.mxu0 0.0
          %420 = vmatprep.mubr.f32.mxu0 0.0
          %421 = vmatmul.mubr.f32.gmra.mxu0 %v341
          %v422 = vpop.f32.mrf.mxu0
          %v423 = vadd.f32 0.0, %v422
          %v424 = vpop.f32.mrf.mxu0
          %425 = vmatprep.mubr.f32.mxu0 0.0
          %426 = vmatmul.mubr.f32.gmra.mxu0 %v344
          %v427 = vpop.f32.mrf.mxu0
          %v428 = vadd.f32 0.0, %v427
          %v429 = vpop.f32.mrf.mxu0
          %430 = vmatprep.mubr.f32.mxu0 0.0
          %431 = vmatmul.mubr.f32.gmra.mxu0 %v347
          %v432 = vpop.f32.mrf.mxu0
          %v433 = vadd.f32 0.0, %v432
          %v434 = vpop.f32.mrf.mxu0
          %435 = vmatprep.mubr.f32.mxu0 0.0
          %436 = vmatmul.mubr.f32.gmra.mxu0 %v350
          %v437 = vpop.f32.mrf.mxu0
          %v438 = vadd.f32 0.0, %v437
          %v439 = vpop.f32.mrf.mxu0
          %440 = vdwg.mxu0
          %v441 = vld [vmem:[#allocation2] sm:$0xff]
          %v442 = vld [vmem:[#allocation2 + $0x8] sm:$0xff]
          %v443 = vld [vmem:[#allocation2 + $0x10] sm:$0xff]
          %v444 = vld [vmem:[#allocation2 + $0x18] sm:$0xff]
          %v445 = vsub.f32 %v441, %v423
          %v446 = vsub.f32 %v442, %v428
          %v447 = vsub.f32 %v443, %v433
          %v448 = vsub.f32 %v444, %v438
          %v449 = vmul.f32 %v445, 0.015873017
          %v450 = vmul.f32 %v446, 0.015873017
          %v451 = vmul.f32 %v447, 0.015873017
          %v452 = vmul.f32 %v448, 0.015873017
          %453 = vst.msk [vmem:[#allocation6] sm:$0xff] %vm282, %v449
          %454 = vst.msk [vmem:[#allocation6 + $0x8] sm:$0xff] %vm282, %v450
          %455 = vst.msk [vmem:[#allocation6 + $0x10] sm:$0xff] %vm282, %v451
          %456 = vst.msk [vmem:[#allocation6 + $0x18] sm:$0xff] %vm282, %v452
        $region32: #{tpu_custom_call.1} parent=23 // pred_fallthru
          _
        // Predicated region
        $region33: #{tpu_custom_call.1} parent=23 // pred_check
          %p457 = pneg %p55
        $region34: #{tpu_custom_call.1} parent=23 // pred_check_branch
          %459 = sbr.rel (%p457) target = $region36
        $region35: #{tpu_custom_call.1} parent=23 // pred_region
          %s461 = ssub.s32 16, 16
          %462 = vsyncadd [#allocation5], %s461
          %s464 = sshll.u32 [#allocation4], 4
          %s465 = int_to_ptr.vmem [resolvable:$true] %s464
          %467 = dma.vmem_to_hbm [thread:$0]  %s465, 16, %s1, [#allocation5]
        $region36: #{tpu_custom_call.1} parent=23 // pred_fallthru
          _
        // Predicated region
        $region37: #{tpu_custom_call.1} parent=23 // pred_check
          %p468 = pneg %p76
        $region38: #{tpu_custom_call.1} parent=23 // pred_check_branch
          %470 = sbr.rel (%p468) target = $region40
        $region39: #{tpu_custom_call.1} parent=23 // pred_region
          %s472 = ssub.s32 512, 512
          %473 = vsyncadd [#allocation7], %s472
          %s474 = sshll.u32 [#allocation6], 4
          %s475 = int_to_ptr.vmem [resolvable:$true] %s474
          %480 = dma.vmem_to_hbm [thread:$0]  %s475, 512, %s2, [#allocation7], 128, 128, 8
        $region40: #{tpu_custom_call.1} parent=23 // pred_fallthru
          _
        // Predicated region
        $region41: #{tpu_custom_call.1} parent=23 // pred_check
          %p481 = pneg %p55
        $region42: #{tpu_custom_call.1} parent=23 // pred_check_branch
          %483 = sbr.rel (%p481) target = $region44
        $region43: #{tpu_custom_call.1} parent=23 // pred_region
          %484 = dma.done [#allocation5], 16
        $region44: #{tpu_custom_call.1} parent=23 // pred_fallthru
          _
        // Predicated region
        $region45: #{tpu_custom_call.1} parent=23 // pred_check
          %p485 = pneg %p76
        $region46: #{tpu_custom_call.1} parent=23 // pred_check_branch
          %487 = sbr.rel (%p485) target = $region48
        $region47: #{tpu_custom_call.1} parent=23 // pred_region
          %488 = dma.done [#allocation7], 512
        $region48: #{tpu_custom_call.1} parent=23 // pred_fallthru
          _
      $region24: #{tpu_custom_call.1} parent=5 // pred_fallthru
        _
      %p489 = scmp.le.s32.totalorder 2, %s11
      // Predicated region
      $region49: #{tpu_custom_call.1} parent=5 // pred_check
        %p490 = pneg %p489
      $region50: #{tpu_custom_call.1} parent=5 // pred_check_branch
        %492 = sbr.rel (%p490) target = $region52
      $region51: #{tpu_custom_call.1} parent=5 // pred_region
        %s493 = ssub.s32 %s11, 2
      $region52: #{tpu_custom_call.1} parent=5 // pred_fallthru
        _
    $region6: #{tpu_custom_call.1} parent=1 // loop_footer
      %s15 = sadd.s32 1, %s11
    $region7: #{tpu_custom_call.1} parent=1 // loop_footer_branch
      %10 = sbr.rel target = $region3
    $region8: #{tpu_custom_call.1} parent=1 // loop_exit
      _
    %494 = vsyncpa [#allocation5], 1
    %s495 = scalar_lea.sflag [#allocation5], 1
    %496 = vsyncpa %s495, 1
    %497 = vsyncpa [#allocation7], 1

</llo_original>
